<compile_context>
chip_gen: v6e
topology: v6e:2x2x1
jax: 0.10.0
libtpu: 0.0.40
codegen_flags: <defaults>
</compile_context>

<pallas_src>
import functools

import numpy as np
import jax
import jax.numpy as jnp
from jax.experimental import pallas as pl
from jax.experimental.pallas import tpu as pltpu


def _round_up(x, m):
    return ((x + m - 1) // m) * m


def _vmem_budget_bytes():
    # Per-generation VMEM budget with ~25% headroom: ~96 MiB on v5e/v6e
    # (128 MiB physical), ~48 MiB on v7x (64 MiB per TensorCore).  Falls back
    # to a v7x-safe 64 MiB physical assumption if the query is unavailable.
    try:
        cap = int(getattr(pltpu.get_tpu_info(), "vmem_capacity_bytes", 64 << 20))
    except Exception:
        cap = 64 << 20
    return max((cap * 3) // 4, 16 << 20)


def _hce_kernel(logits_ref, mt_ref, ids_ref, out_ref, *, n_groups, n_rows, den_col):
    logits = logits_ref[...].astype(jnp.float32)              # (TB, C)

    # Numerically-stable softmax pieces.  The denominator is produced by the
    # MXU matmul below (all-ones column of mt at den_col), so there is no
    # separate cross-lane reduction here.
    m = jnp.max(logits, axis=-1, keepdims=True)                # (TB, 1)
    e = jnp.exp(logits - m)                                     # (TB, C)

    # Unnormalized group sums for every hierarchy node + the softmax
    # denominator, all in one MXU pass.
    node_sums = jnp.dot(e, mt_ref[...],
                        preferred_element_type=jnp.float32)    # (TB, Np)
    log_den = jnp.log(node_sums[:, den_col:den_col + 1])        # (TB, 1)

    # log p_g = log(node_sum) - log(den); clip(p, 0, 1) -> min(., 0);
    # PyTorch BCELoss clamps log at -100 (log(0) -> -inf -> clamped).
    logp = jnp.log(node_sums) - log_den
    neg_bce = -jnp.maximum(jnp.minimum(logp, 0.0), -100.0)      # (TB, Np), in [0, 100]

    # Per-sample group-selection weights from the tiny int32 node-id table
    # (-1 marks unused slots and matches no node).  G is the hierarchy depth
    # (tiny); for large G build w with a one-hot matmul on the MXU instead of
    # this VALU compare/accumulate chain.
    tb, np_ = neg_bce.shape
    ids = ids_ref[...]                                          # (TB, G) int32
    iota = jax.lax.broadcasted_iota(jnp.int32, (tb, np_), 1)
    w = jnp.zeros((tb, np_), dtype=jnp.float32)
    for g in range(n_groups):                                   # static, unrolled
        w = w + (iota == ids[:, g:g + 1]).astype(jnp.float32)

    # Mask rows past the real batch: the last grid step may be a partial tile
    # whose out-of-bounds rows hold garbage (possibly NaN); jnp.where discards
    # the untaken branch so nothing leaks into the partial sums.
    row = (pl.program_id(0) * tb
           + jax.lax.broadcasted_iota(jnp.int32, (tb, np_), 0))
    contrib = jnp.where(row < n_rows, w * neg_bce, 0.0)

    # Per-node partial sums for this tile (sublane reduction only; cross-tile
    # and cross-lane reductions happen outside the kernel).
    out_ref[...] = jnp.sum(contrib, axis=0, keepdims=True)[None]


def hierarchical_ce_loss(logits, node_matrix, group_ids, *, tile_b=None):
    """logits: (N, C) float (any float dtype, consumed as-is -- no wrapper
    cast/pad pass over HBM); node_matrix: (num_nodes, C) 0/1 leaf membership;
    group_ids: (N, G) int32 node ids per sample, -1 marks unused slots."""
    n, c = logits.shape
    num_nodes = node_matrix.shape[0]
    g = group_ids.shape[1]

    # Node axis: one extra all-ones column carries the softmax denominator.
    # Round to 128 lanes only (native MXU width on v5e; never over-pad a small
    # hierarchy to 256 on v6e/v7x).
    den_col = num_nodes
    n_pad = _round_up(num_nodes + 1, 128)

    # Membership matrix transposed to (C, Np), f32 (0/1 exact), built once.
    mt = jnp.zeros((c, n_pad), jnp.float32)
    mt = mt.at[:, :num_nodes].set(jnp.asarray(node_matrix, jnp.float32).T)
    mt = mt.at[:, den_col].set(1.0)

    ids = jnp.asarray(group_ids, jnp.int32)                     # (N, G)

    # ---- VMEM-budget-driven batch tile ------------------------------------
    budget = _vmem_budget_bytes()
    itemsize = jnp.dtype(logits.dtype).itemsize
    c_lanes = _round_up(c, 128)
    # Resident (single-buffered) membership matrix + double-buffered out rows.
    fixed_bytes = 4 * _round_up(c, 8) * n_pad + 2 * 4 * 8 * n_pad
    # Double-buffered logits + ids bytes per batch row (lane-padded layouts).
    per_row_bytes = 2 * (c_lanes * itemsize + 128 * 4)
    # TODO(synk): for very large C x num_nodes (membership matrix >> VMEM),
    # add a second grid axis over node chunks (or class chunks with a VMEM
    # accumulator) instead of keeping mt fully resident.
    if tile_b is None:
        avail = max(budget - fixed_bytes, 8 * per_row_bytes)
        tile_b = max(8, min(1024, (avail // per_row_bytes) // 8 * 8))
    tile_b = max(8, (int(tile_b) // 8) * 8)
    tile_b = min(tile_b, _round_up(n, 8))
    num_tiles = pl.cdiv(n, tile_b)                              # ragged tail OK

    kernel = functools.partial(_hce_kernel, n_groups=g, n_rows=n,
                               den_col=den_col)

    partials = pl.pallas_call(
        kernel,
        out_shape=jax.ShapeDtypeStruct((num_tiles, 1, n_pad), jnp.float32),
        grid_spec=pltpu.PrefetchScalarGridSpec(
            num_scalar_prefetch=0,
            grid=(num_tiles,),
            in_specs=[
                # Logits stream through untouched (native dtype, no eager pad).
                pl.BlockSpec((tile_b, c), lambda i: (i, 0)),
                # Resident membership matrix: constant index_map -> fetched
                # once; single-buffered to halve its VMEM footprint.
                pl.BlockSpec((c, n_pad), lambda i: (0, 0),
                             pipeline_mode=pl.Buffered(1)),
                pl.BlockSpec((tile_b, g), lambda i: (i, 0)),
            ],
            out_specs=pl.BlockSpec((1, 1, n_pad), lambda i: (i, 0, 0)),
        ),
        compiler_params=pltpu.CompilerParams(
            dimension_semantics=("parallel",),
            vmem_limit_bytes=int(budget)),
    )(logits, mt, ids)

    # reduction='mean' over the batch; padded node lanes and masked tail rows
    # carry exact zeros.
    return jnp.sum(partials) / n


# ----------------------------------------------------------------------------
# Synthetic class hierarchy (deterministic, no file loads):
#   16 leaf classes (0..15), 4 internal nodes (16..19) each parenting 4 leaves,
#   1 root node (20) parenting the internal nodes.
#   mapping[leaf i] = [i]; mapping[16+k] = [4k..4k+3]; mapping[root] = []
#   predecessors(leaf i) = [16 + i // 4]
# ----------------------------------------------------------------------------
NUM_LEAF = 16
NUM_INTERNAL = 4


def build_mapping_and_parents():
    mapping = {i: [i] for i in range(NUM_LEAF)}
    parents = {}
    root = NUM_LEAF + NUM_INTERNAL
    for k in range(NUM_INTERNAL):
        node = NUM_LEAF + k
        children = list(range(4 * k, 4 * k + 4))
        mapping[node] = children
        for cidx in children:
            parents[cidx] = [node]
        parents[node] = [root]
    mapping[root] = []          # root's children are internal (>= num_leaf)
    parents[root] = []
    return mapping, parents


def build_node_matrix(mapping, num_nodes, num_classes):
    mat = np.zeros((num_nodes, num_classes), dtype=np.float32)
    for node, leaves in mapping.items():
        for cidx in leaves:
            mat[node, cidx] = 1.0
    return mat


def build_group_ids(targets, parents, max_groups):
    n = len(targets)
    ids = np.full((n, max_groups), -1, dtype=np.int32)
    for i, t in enumerate(targets):
        groups = [int(t)] + [int(p) for p in parents[int(t)]]
        for gi, node in enumerate(groups[:max_groups]):
            ids[i, gi] = node
    return ids


def reference_loss(logits, targets, mapping, parents):
    """Plain-JAX mirror of the PyTorch per-sample loop."""
    probs = jax.nn.softmax(logits.astype(jnp.float32), axis=-1)
    losses = []
    for i, t in enumerate(targets):
        t = int(t)
        groups = [t] + [int(p) for p in parents[t]]
        terms = []
        for node in groups:
            idx = mapping[node]
            if len(idx) == 0:
                p = jnp.float32(0.0)
            else:
                p = jnp.sum(probs[i, jnp.asarray(idx, dtype=jnp.int32)])
            p = jnp.clip(p, 0.0, 1.0)
            terms.append(-jnp.maximum(jnp.log(p), -100.0))
        losses.append(sum(terms))
    return jnp.mean(jnp.stack(losses))


if __name__ == "__main__":
    key = jax.random.PRNGKey(0)
    k_logits, k_tgt = jax.random.split(key)

    # N deliberately NOT a multiple of the tile size, to exercise the ragged
    # tail (pl.cdiv grid + in-kernel row masking).
    N, C = 50, NUM_LEAF
    logits = jax.random.normal(k_logits, (N, C), dtype=jnp.float32)
    targets = np.asarray(jax.random.randint(k_tgt, (N,), 0, NUM_LEAF))

    mapping, parents = build_mapping_and_parents()
    num_nodes = NUM_LEAF + NUM_INTERNAL + 1
    max_groups = 1 + max(len(parents[t]) for t in range(NUM_LEAF))   # = 2

    node_matrix = build_node_matrix(mapping, num_nodes, C)
    group_ids = build_group_ids(targets, parents, max_groups)

    ref = jax.block_until_ready(reference_loss(logits, targets, mapping, parents))

    # Explicit small tile -> 4 grid steps including a partial tail tile.
    loss = jax.block_until_ready(
        hierarchical_ce_loss(logits, node_matrix, group_ids, tile_b=16))
    np.testing.assert_allclose(np.asarray(loss), np.asarray(ref),
                               rtol=1e-4, atol=1e-4)

    # VMEM-budget-driven auto tile path.
    loss_auto = jax.block_until_ready(
        hierarchical_ce_loss(logits, node_matrix, group_ids))
    np.testing.assert_allclose(np.asarray(loss_auto), np.asarray(ref),
                               rtol=1e-4, atol=1e-4)

    print("KERNEL_OK")
</pallas_src>

<mosaic_0001>
module attributes {stable_mosaic.version = 11 : i64} {
  func.func @_hce_kernel(%arg0: i32, %arg1: memref<16x16xf32, #tpu.memory_space<vmem>>, %arg2: memref<16x128xf32, #tpu.memory_space<vmem>>, %arg3: memref<16x2xi32, #tpu.memory_space<vmem>>, %arg4: memref<1x1x128xf32, #tpu.memory_space<vmem>>) attributes {dimension_semantics = [#tpu.dimension_semantics<parallel>], iteration_bounds = array<i64: 4>, scalar_prefetch = 0 : i64, scratch_operands = 0 : i64, tpu.core_type = #tpu.core_type<tc>, window_params = [{transform_indices = @transform_0, window_bounds = array<i64: 16, 16>}, {pipeline_mode = #tpu.pipeline_mode<synchronous>, transform_indices = @transform_1, window_bounds = array<i64: 16, 128>}, {transform_indices = @transform_2, window_bounds = array<i64: 16, 2>}, {transform_indices = @transform_3, window_bounds = array<i64: 1, 1, 128>}]} {
    %c0 = arith.constant 0 : index
    %c0_0 = arith.constant 0 : index
    %0 = vector.load %arg1[%c0, %c0_0] : memref<16x16xf32, #tpu.memory_space<vmem>>, vector<16x16xf32>
    %cst = arith.constant dense<0xFF800000> : vector<16xf32>
    %1 = vector.multi_reduction <maximumf>, %0, %cst [1] : vector<16x16xf32> to vector<16xf32>
    %2 = vector.shape_cast %1 : vector<16xf32> to vector<16x1xf32>
    %3 = vector.broadcast %2 : vector<16x1xf32> to vector<16x16xf32>
    %4 = arith.subf %0, %3 : vector<16x16xf32>
    %5 = math.exp %4 : vector<16x16xf32>
    %c0_1 = arith.constant 0 : index
    %c0_2 = arith.constant 0 : index
    %6 = vector.load %arg2[%c0_1, %c0_2] : memref<16x128xf32, #tpu.memory_space<vmem>>, vector<16x128xf32>
    %cst_3 = arith.constant dense<0.000000e+00> : vector<16x128xf32>
    %7 = tpu.matmul %5, %6, %cst_3 {dimension_numbers = #tpu.dot_dimension_numbers<[1], [0], [0], [1], [0, 0, 1, 1], [], []>} : vector<16x16xf32>, vector<16x128xf32>, vector<16x128xf32> -> vector<16x128xf32>
    %8 = vector.extract_strided_slice %7 {offsets = [0, 21], sizes = [16, 1], strides = [1, 1]} : vector<16x128xf32> to vector<16x1xf32>
    %9 = math.log %8 : vector<16x1xf32>
    %10 = math.log %7 : vector<16x128xf32>
    %11 = vector.broadcast %9 : vector<16x1xf32> to vector<16x128xf32>
    %12 = arith.subf %10, %11 : vector<16x128xf32>
    %cst_4 = arith.constant 0.000000e+00 : f32
    %13 = vector.broadcast %cst_4 : f32 to vector<16x128xf32>
    %14 = arith.minimumf %12, %13 : vector<16x128xf32>
    %cst_5 = arith.constant -1.000000e+02 : f32
    %15 = vector.broadcast %cst_5 : f32 to vector<16x128xf32>
    %16 = arith.maximumf %14, %15 : vector<16x128xf32>
    %cst_6 = arith.constant 0.000000e+00 : f32
    %17 = vector.broadcast %cst_6 : f32 to vector<16x128xf32>
    %18 = arith.subf %17, %16 : vector<16x128xf32>
    %c0_7 = arith.constant 0 : index
    %c0_8 = arith.constant 0 : index
    %19 = vector.load %arg3[%c0_7, %c0_8] : memref<16x2xi32, #tpu.memory_space<vmem>>, vector<16x2xi32>
    %20 = tpu.iota {dimensions = array<i32: 1>} : vector<16x128xi32>
    %cst_9 = arith.constant 0.000000e+00 : f32
    %21 = vector.broadcast %cst_9 : f32 to vector<16x128xf32>
    %22 = vector.extract_strided_slice %19 {offsets = [0, 0], sizes = [16, 1], strides = [1, 1]} : vector<16x2xi32> to vector<16x1xi32>
    %23 = vector.broadcast %22 : vector<16x1xi32> to vector<16x128xi32>
    %24 = arith.cmpi eq, %20, %23 : vector<16x128xi32>
    %25 = arith.extui %24 : vector<16x128xi1> to vector<16x128xi32>
    %26 = arith.sitofp %25 : vector<16x128xi32> to vector<16x128xf32>
    %27 = arith.addf %21, %26 : vector<16x128xf32>
    %28 = vector.extract_strided_slice %19 {offsets = [0, 1], sizes = [16, 1], strides = [1, 1]} : vector<16x2xi32> to vector<16x1xi32>
    %29 = vector.broadcast %28 : vector<16x1xi32> to vector<16x128xi32>
    %30 = arith.cmpi eq, %20, %29 : vector<16x128xi32>
    %31 = arith.extui %30 : vector<16x128xi1> to vector<16x128xi32>
    %32 = arith.sitofp %31 : vector<16x128xi32> to vector<16x128xf32>
    %33 = arith.addf %27, %32 : vector<16x128xf32>
    %c16_i32 = arith.constant 16 : i32
    %34 = arith.muli %arg0, %c16_i32 : i32
    %35 = tpu.iota {dimensions = array<i32: 0>} : vector<16x128xi32>
    %36 = vector.broadcast %34 : i32 to vector<16x128xi32>
    %37 = arith.addi %36, %35 : vector<16x128xi32>
    %c50_i32 = arith.constant 50 : i32
    %38 = vector.broadcast %c50_i32 : i32 to vector<16x128xi32>
    %39 = arith.cmpi slt, %37, %38 : vector<16x128xi32>
    %40 = arith.mulf %33, %18 : vector<16x128xf32>
    %cst_10 = arith.constant 0.000000e+00 : f32
    %41 = vector.broadcast %cst_10 : f32 to vector<16x128xf32>
    %42 = arith.select %39, %40, %41 : vector<16x128xi1>, vector<16x128xf32>
    %cst_11 = arith.constant dense<0.000000e+00> : vector<128xf32>
    %43 = vector.multi_reduction <add>, %42, %cst_11 [0] : vector<16x128xf32> to vector<128xf32>
    %44 = vector.shape_cast %43 : vector<128xf32> to vector<1x128xf32>
    %45 = vector.shape_cast %44 : vector<1x128xf32> to vector<1x1x128xf32>
    %c0_12 = arith.constant 0 : index
    %c0_13 = arith.constant 0 : index
    %c0_14 = arith.constant 0 : index
    %46 = vector.load %arg4[%c0_12, %c0_13, %c0_14] : memref<1x1x128xf32, #tpu.memory_space<vmem>>, vector<1x1x128xf32>
    tpu.vector_store %arg4[%c0_12, %c0_13, %c0_14], %45 {strides = array<i32>} : memref<1x1x128xf32, #tpu.memory_space<vmem>>, vector<1x1x128xf32>,
    return
  }
  func.func @transform_0(%arg0: i32) -> (i32, i32) {
    %c0_i32 = arith.constant 0 : i32
    %c0_i32_0 = arith.constant 0 : i32
    return %arg0, %c0_i32 : i32, i32
  }
  func.func @transform_1(%arg0: i32) -> (i32, i32) {
    %c0_i32 = arith.constant 0 : i32
    %c0_i32_0 = arith.constant 0 : i32
    %c0_i32_1 = arith.constant 0 : i32
    return %c0_i32, %c0_i32_0 : i32, i32
  }
  func.func @transform_2(%arg0: i32) -> (i32, i32) {
    %c0_i32 = arith.constant 0 : i32
    %c0_i32_0 = arith.constant 0 : i32
    return %arg0, %c0_i32 : i32, i32
  }
  func.func @transform_3(%arg0: i32) -> (i32, i32, i32) {
    %c0_i32 = arith.constant 0 : i32
    %c0_i32_0 = arith.constant 0 : i32
    %c0_i32_1 = arith.constant 0 : i32
    return %arg0, %c0_i32, %c0_i32_0 : i32, i32, i32
  }
}

</mosaic_0001>

<llo_original>
// kernel: tpu_custom_call.1
$region0: #{tpu_custom_call.1}
  #allocation0 [shape = 'u32[]', space=smem, size = 0x4, offset = 0x4, fixed_abs, tag = 'smem constant byte address 0x4 - core index']
  #allocation1 [shape = 'u32[144,128]{1,0:T(1,128)}', space=vmem, size = 0x12000, scoped, tag = 'internal scratch']
  %s0 = inlined_call_operand.vmem [shape: f32[50,16], index: 0, kind: input, shape index: {}]
  %s1 = inlined_call_operand.vmem [shape: f32[16,128], index: 1, kind: input, shape index: {}]
  %s2 = inlined_call_operand.vmem [shape: s32[50,2], index: 2, kind: input, shape index: {}]
  %s3 = inlined_call_operand.hbm [shape: f32[4,1,128], index: 3, kind: output, shape index: {}]
  %s4 = sld [smem:[#allocation0]]
  $region45: #{tpu_custom_call.1} parent=0
    _
  %s6 = ssub.s32 1, %s4
  %s7 = scalar_select 0, %s6, %s4
  $region1: #{tpu_custom_call.1} parent=0
    #allocation2 [shape = 'u8[1024]{0}', space=vmem, size = 0x400, scoped, tag = 'output window, operand 0']
    #allocation3 [shape = 's32[2]{0}', space=sflag, size = 0x8, scoped, tag = 'scoped memory for tpu_custom_call.1']
    %8 = vsyncpa [#allocation3], 0
    %s9 = scalar_lea.sflag [#allocation3], 1
    %10 = vsyncpa %s9, 0
    loop: start=0, step=1, limit=6
    $region2: #{tpu_custom_call.1} parent=1 // loop_pre_header
      _
    $region3: #{tpu_custom_call.1} parent=1 // loop_header
      %s12 = sphi 0, %s16
      %p13 = scmp.ge.s32.totalorder %s12, 6
      %s22 = sphi 0, %s24
      %s25 = sphi 0, %s22
      %s26 = sphi 0, %s25
      %s42 = sphi 0, %s26
      %s46 = sphi 0, %s46
      %s48 = sphi 0, %s46
      %s49 = sphi 0, %s48
      %s63 = sphi 0, %s49
      %s69 = sphi 0, %s71
      %s72 = sphi 0, %s69
      %s73 = sphi 0, %s72
      %s89 = sphi 0, %s73
      %s95 = sphi 0, %s97
      %s98 = sphi 0, %s95
      %s99 = sphi 0, %s98
      %s115 = sphi 0, %s99
    $region4: #{tpu_custom_call.1} parent=1 // loop_header_branch
      %15 = sbr.rel (%p13) target = $region8
    $region5: #{tpu_custom_call.1} parent=1 // loop_body
      %s17 = ssub.s32 %s12, 1
      %s18 = ssub.s32 %s12, 2
      %s19 = sadd.s32 %s12, 1
      %s20 = ssub.s32 %s12, %s19
      %p21 = scmp.eq.s32.totalorder %s20, 0
      %s23 = sadd.s32 %s22, 1
      %s24 = scalar_select %p21, %s22, %s23
      %p27 = pneg %p21
      %p28 = scmp.eq.s32.totalorder %s12, 3
      %p29 = por %p27, %p28
      %p30 = scmp.ne.s32.totalorder %s22, %s25
      %p31 = scmp.eq.s32.totalorder %s12, 0
      %p32 = por %p30, %p31
      %p33 = scmp.ne.s32.totalorder %s22, %s25
      %p34 = scmp.eq.s32.totalorder %s17, 3
      %p35 = por %p33, %p34
      %p36 = scmp.ne.s32.totalorder %s25, %s26
      %p37 = scmp.eq.s32.totalorder %s17, 0
      %p38 = por %p36, %p37
      %p39 = scmp.ne.s32.totalorder %s25, %s26
      %p40 = scmp.eq.s32.totalorder %s18, 3
      %p41 = por %p39, %p40
      %p43 = scmp.ne.s32.totalorder %s26, %s42
      %p44 = scmp.eq.s32.totalorder %s18, 0
      %p45 = por %p43, %p44
      %s47 = sadd.s32 %s46, 1
      %p50 = scmp.eq.s32.totalorder %s12, 3
      %p51 = scmp.ne.s32.totalorder %s46, %s48
      %p52 = scmp.eq.s32.totalorder %s12, 0
      %p53 = por %p51, %p52
      %p54 = scmp.ne.s32.totalorder %s46, %s48
      %p55 = scmp.eq.s32.totalorder %s17, 3
      %p56 = por %p54, %p55
      %p57 = scmp.ne.s32.totalorder %s48, %s49
      %p58 = scmp.eq.s32.totalorder %s17, 0
      %p59 = por %p57, %p58
      %p60 = scmp.ne.s32.totalorder %s48, %s49
      %p61 = scmp.eq.s32.totalorder %s18, 3
      %p62 = por %p60, %p61
      %p64 = scmp.ne.s32.totalorder %s49, %s63
      %p65 = scmp.eq.s32.totalorder %s18, 0
      %p66 = por %p64, %p65
      %s67 = ssub.s32 %s12, %s19
      %p68 = scmp.eq.s32.totalorder %s67, 0
      %s70 = sadd.s32 %s69, 1
      %s71 = scalar_select %p68, %s69, %s70
      %p74 = pneg %p68
      %p75 = scmp.eq.s32.totalorder %s12, 3
      %p76 = por %p74, %p75
      %p77 = scmp.ne.s32.totalorder %s69, %s72
      %p78 = scmp.eq.s32.totalorder %s12, 0
      %p79 = por %p77, %p78
      %p80 = scmp.ne.s32.totalorder %s69, %s72
      %p81 = scmp.eq.s32.totalorder %s17, 3
      %p82 = por %p80, %p81
      %p83 = scmp.ne.s32.totalorder %s72, %s73
      %p84 = scmp.eq.s32.totalorder %s17, 0
      %p85 = por %p83, %p84
      %p86 = scmp.ne.s32.totalorder %s72, %s73
      %p87 = scmp.eq.s32.totalorder %s18, 3
      %p88 = por %p86, %p87
      %p90 = scmp.ne.s32.totalorder %s73, %s89
      %p91 = scmp.eq.s32.totalorder %s18, 0
      %p92 = por %p90, %p91
      %s93 = ssub.s32 %s12, %s19
      %p94 = scmp.eq.s32.totalorder %s93, 0
      %s96 = sadd.s32 %s95, 1
      %s97 = scalar_select %p94, %s95, %s96
      %p100 = pneg %p94
      %p101 = scmp.eq.s32.totalorder %s12, 3
      %p102 = por %p100, %p101
      %p103 = scmp.ne.s32.totalorder %s95, %s98
      %p104 = scmp.eq.s32.totalorder %s12, 0
      %p105 = por %p103, %p104
      %p106 = scmp.ne.s32.totalorder %s95, %s98
      %p107 = scmp.eq.s32.totalorder %s17, 3
      %p108 = por %p106, %p107
      %p109 = scmp.ne.s32.totalorder %s98, %s99
      %p110 = scmp.eq.s32.totalorder %s17, 0
      %p111 = por %p109, %p110
      %p112 = scmp.ne.s32.totalorder %s98, %s99
      %p113 = scmp.eq.s32.totalorder %s18, 3
      %p114 = por %p112, %p113
      %p116 = scmp.ne.s32.totalorder %s99, %s115
      %p117 = scmp.eq.s32.totalorder %s18, 0
      %p118 = por %p116, %p117
      %p119 = scmp.le.s32.totalorder 1, %s12
      %p120 = scmp.lt.s32.totalorder %s12, 5
      %p121 = pnand %p119, %p120
      %p122 = pneg %p121
      // Predicated region
      $region9: #{tpu_custom_call.1} parent=5 // pred_check
        _
      $region10: #{tpu_custom_call.1} parent=5 // pred_check_branch
        %124 = sbr.rel (%p121) target = $region12
      $region11: #{tpu_custom_call.1} parent=5 // pred_region
        %s125 = ssub.s32 %s12, 1
        // Predicated region
        $region13: #{tpu_custom_call.1} parent=11 // pred_check
          %p126 = pneg %p59
        $region14: #{tpu_custom_call.1} parent=11 // pred_check_branch
          %128 = sbr.rel (%p126) target = $region16
        $region15: #{tpu_custom_call.1} parent=11 // pred_region
          _
        $region16: #{tpu_custom_call.1} parent=11 // pred_fallthru
          _
      $region12: #{tpu_custom_call.1} parent=5 // pred_fallthru
        _
      %p129 = scmp.lt.s32.totalorder %s12, 4
      // Predicated region
      $region17: #{tpu_custom_call.1} parent=5 // pred_check
        %p130 = pneg %p129
      $region18: #{tpu_custom_call.1} parent=5 // pred_check_branch
        %132 = sbr.rel (%p130) target = $region20
      $region19: #{tpu_custom_call.1} parent=5 // pred_region
        // Predicated region
        $region21: #{tpu_custom_call.1} parent=19 // pred_check
          %p133 = pneg %p32
        $region22: #{tpu_custom_call.1} parent=19 // pred_check_branch
          %135 = sbr.rel (%p133) target = $region24
        $region23: #{tpu_custom_call.1} parent=19 // pred_region
          %s136 = smul.u32 2, %s12
          %s137 = ssub.s32 7, %s136
          %p138 = scmp.lt.s32.totalorder %s137, 2
          %s139 = scalar_select %p138, %s137, 2
          %s140 = smul.u32 128, %s139
          %p141 = scmp.lt.s32.totalorder %s136, 6
          %s142 = scalar_select %p141, %s136, 6
          %s143 = smul.addr %s142, 8
          %s144 = scalar_lea.vmem %s0, %s143
          %s145 = smul.u32 2, %s12
          %s146 = ssub.s32 7, %s145
          %p147 = scmp.lt.s32.totalorder %s146, 2
          %s148 = scalar_select %p147, %s146, 2
          %s149 = smul.u32 128, %s148
        $region24: #{tpu_custom_call.1} parent=19 // pred_fallthru
          _
        // Predicated region
        $region25: #{tpu_custom_call.1} parent=19 // pred_check
          %p150 = pneg %p79
        $region26: #{tpu_custom_call.1} parent=19 // pred_check_branch
          %152 = sbr.rel (%p150) target = $region28
        $region27: #{tpu_custom_call.1} parent=19 // pred_region
          %s153 = smul.u32 2, %s12
          %s154 = ssub.s32 7, %s153
          %p155 = scmp.lt.s32.totalorder %s154, 2
          %s156 = scalar_select %p155, %s154, 2
          %s157 = smul.u32 128, %s156
          %p158 = scmp.lt.s32.totalorder %s153, 6
          %s159 = scalar_select %p158, %s153, 6
          %s160 = smul.addr %s159, 8
          %s161 = scalar_lea.vmem %s2, %s160
          %s162 = smul.u32 2, %s12
          %s163 = ssub.s32 7, %s162
          %p164 = scmp.lt.s32.totalorder %s163, 2
          %s165 = scalar_select %p164, %s163, 2
          %s166 = smul.u32 128, %s165
        $region28: #{tpu_custom_call.1} parent=19 // pred_fallthru
          _
      $region20: #{tpu_custom_call.1} parent=5 // pred_fallthru
        _
      %p167 = scmp.le.s32.totalorder 1, %s12
      %p168 = scmp.lt.s32.totalorder %s12, 5
      %p169 = pnand %p167, %p168
      %p170 = pneg %p169
      // Predicated region
      $region29: #{tpu_custom_call.1} parent=5 // pred_check
        _
      $region30: #{tpu_custom_call.1} parent=5 // pred_check_branch
        %172 = sbr.rel (%p169) target = $region32
      $region31: #{tpu_custom_call.1} parent=5 // pred_region
        %s173 = ssub.s32 %s12, 1
        %s174 = smul.u32 2, %s17
        %s175 = ssub.s32 7, %s174
        %p176 = scmp.lt.s32.totalorder %s175, 2
        %s177 = scalar_select %p176, %s175, 2
        %s178 = smul.u32 128, %s177
        %p179 = scmp.lt.s32.totalorder %s174, 6
        %s180 = scalar_select %p179, %s174, 6
        %s181 = smul.addr %s180, 8
        %s182 = scalar_lea.vmem %s0, %s181
        %p183 = pneg %p38
        %p184 = pneg %p35
        %p185 = pneg %p59
        %p186 = pneg %p56
        %s187 = smul.u32 2, %s17
        %s188 = ssub.s32 7, %s187
        %p189 = scmp.lt.s32.totalorder %s188, 2
        %s190 = scalar_select %p189, %s188, 2
        %s191 = smul.u32 128, %s190
        %p192 = scmp.lt.s32.totalorder %s187, 6
        %s193 = scalar_select %p192, %s187, 6
        %s194 = smul.addr %s193, 8
        %s195 = scalar_lea.vmem %s2, %s194
        %p196 = pneg %p85
        %p197 = pneg %p82
        %p198 = pneg %p111
        %p199 = pneg %p108
        %s200 = sand.u32 %s98, 1
        %s201 = scalar_lea.sflag [#allocation3], %s200
        %s202 = sand.u32 %s98, 1
        %s203 = scalar_lea.vmem [#allocation2], %s202
        %s204 = smul.u32 2, %s17
        %s205 = ssub.s32 7, %s204
        %p206 = scmp.lt.s32.totalorder %s205, 2
        %s207 = scalar_select %p206, %s205, 2
        %s208 = smul.u32 128, %s207
        %p209 = scmp.lt.s32.totalorder %s204, 6
        %s210 = scalar_select %p209, %s204, 6
        %s211 = smul.addr %s210, 8
        %s212 = scalar_lea.vmem %s0, %s211
        %s213 = smul.u32 2, %s17
        %s214 = ssub.s32 7, %s213
        %p215 = scmp.lt.s32.totalorder %s214, 2
        %s216 = scalar_select %p215, %s214, 2
        %s217 = smul.u32 128, %s216
        %s218 = smul.u32 2, %s17
        %s219 = ssub.s32 7, %s218
        %p220 = scmp.lt.s32.totalorder %s219, 2
        %s221 = scalar_select %p220, %s219, 2
        %s222 = smul.u32 128, %s221
        %p223 = scmp.lt.s32.totalorder %s218, 6
        %s224 = scalar_select %p223, %s218, 6
        %s225 = smul.addr %s224, 8
        %s226 = scalar_lea.vmem %s2, %s225
        %s227 = smul.u32 2, %s17
        %s228 = ssub.s32 7, %s227
        %p229 = scmp.lt.s32.totalorder %s228, 2
        %s230 = scalar_select %p229, %s228, 2
        %s231 = smul.u32 128, %s230
        %v232 = vld [vmem:[%s212] sm:$0xff]
        %v233 = vld [vmem:[%s212 + $0x8] sm:$0xff]
        %vm234 = vcmask 130048
        %v235 = vsel %vm234, %v232, -inf
        %236 = vmax.xlane.f32.xlu0 %v235
        %v237 = vpop.xlane.xlu0 %236
        %v238 = vsel %vm234, %v233, -inf
        %239 = vmax.xlane.f32.xlu0 %v238
        %v240 = vpop.xlane.xlu0 %239
        %v241 = vsub.f32 %v232, %v237
        %v242 = vsub.f32 %v233, %v240
        %v243 = vmul.f32 %v241, 1.442695
        %v244 = vpow.pop %v243
        %v245 = vmul.f32 %v242, 1.442695
        %v246 = vpow.pop %v245
        %v247 = vld [vmem:[%s1] sm:$0xff]
        %v248 = vld [vmem:[%s1 + $0x8] sm:$0xff]
        %v250 = vsel %vm234, %v244, 0
        %v253 = vsel %vm234, %v246, 0
        %255 = vmatprep.subr.mxu0 0.0
        %256 = vmatpush1.msra.mxu0 0.0
        %257 = vmatprep.subr.mxu0 0.0
        %258 = vmatpush1.msra.mxu0 0.0
        %259 = vmatprep.subr.mxu0 0.0
        %260 = vmatpush1.msra.mxu0 0.0
        %261 = vmatprep.subr.mxu0 0.0
        %262 = vmatpush1.msra.mxu0 0.0
        %263 = vmatprep.subr.mxu0 0.0
        %264 = vmatpush1.msra.mxu0 0.0
        %265 = vmatprep.subr.mxu0 0.0
        %266 = vmatpush1.msra.mxu0 0.0
        %267 = vmatprep.subr.mxu0 0.0
        %268 = vmatpush1.msra.mxu0 0.0
        %269 = vmatprep.subr.mxu0 0.0
        %270 = vmatpush1.msra.mxu0 0.0
        %271 = vmatprep.subr.mxu0 0.0
        %272 = vmatpush1.msra.mxu0 0.0
        %273 = vmatprep.subr.mxu0 0.0
        %274 = vmatpush1.msra.mxu0 0.0
        %275 = vmatprep.subr.mxu0 0.0
        %276 = vmatpush1.msra.mxu0 0.0
        %277 = vmatprep.subr.mxu0 0.0
        %278 = vmatpush1.msra.mxu0 0.0
        %279 = vmatprep.subr.mxu0 0.0
        %280 = vmatpush1.msra.mxu0 0.0
        %281 = vmatprep.subr.mxu0 0.0
        %282 = vmatpush1.msra.mxu0 0.0
        %283 = vmatprep.subr.mxu0 0.0
        %284 = vmatpush1.msra.mxu0 %v248
        %285 = vmatprep.subr.mxu0 0.0
        %286 = vmatpush1.msra.mxu0 %v247
        %287 = vmatprep.subr.mxu0 0.0
        %288 = vmatpush2.msra.mxu0 0.0
        %289 = vmatprep.subr.mxu0 0.0
        %290 = vmatpush2.msra.mxu0 0.0
        %291 = vmatprep.subr.mxu0 0.0
        %292 = vmatpush2.msra.mxu0 0.0
        %293 = vmatprep.subr.mxu0 0.0
        %294 = vmatpush2.msra.mxu0 0.0
        %295 = vmatprep.subr.mxu0 0.0
        %296 = vmatpush2.msra.mxu0 0.0
        %297 = vmatprep.subr.mxu0 0.0
        %298 = vmatpush2.msra.mxu0 0.0
        %299 = vmatprep.subr.mxu0 0.0
        %300 = vmatpush2.msra.mxu0 0.0
        %301 = vmatprep.subr.mxu0 0.0
        %302 = vmatpush2.msra.mxu0 0.0
        %303 = vmatprep.subr.mxu0 0.0
        %304 = vmatpush2.msra.mxu0 0.0
        %305 = vmatprep.subr.mxu0 0.0
        %306 = vmatpush2.msra.mxu0 0.0
        %307 = vmatprep.subr.mxu0 0.0
        %308 = vmatpush2.msra.mxu0 0.0
        %309 = vmatprep.subr.mxu0 0.0
        %310 = vmatpush2.msra.mxu0 0.0
        %311 = vmatprep.subr.mxu0 0.0
        %312 = vmatpush2.msra.mxu0 0.0
        %313 = vmatprep.subr.mxu0 0.0
        %314 = vmatpush2.msra.mxu0 0.0
        %315 = vmatprep.subr.mxu0 0.0
        %316 = vmatpush2.msra.mxu0 0.0
        %317 = vmatprep.subr.mxu0 0.0
        %318 = vmatpush2.msra.mxu0 0.0
        %319 = vmatprep.mubr.f32.mxu0 0.0
        %320 = vmatmul.mubr.f32.gmra.mxu0 %v250
        %v321 = vpop.f32.mrf.mxu0
        %v322 = vadd.f32 0.0, %v321
        %v323 = vpop.f32.mrf.mxu0
        %324 = vmatprep.mubr.f32.mxu0 0.0
        %325 = vmatmul.mubr.f32.gmra.mxu0 %v253
        %v326 = vpop.f32.mrf.mxu0
        %v327 = vadd.f32 0.0, %v326
        %v328 = vpop.f32.mrf.mxu0
        %329 = vdwg.mxu0
        %v330 = vlog2.pop %v322
        %v331 = vmul.f32 %v330, 0.6931472
        %v332 = vlog2.pop %v327
        %v333 = vmul.f32 %v332, 0.6931472
        %335 = vset.pattern.permute.xlu0 21
        %336 = vperm.xlu0 %335, %v331
        %v337 = vpop.permute.xlu0 %336
        %340 = vset.pattern.permute.xlu0 21
        %341 = vperm.xlu0 %340, %v333
        %v342 = vpop.permute.xlu0 %341
        %v344 = vsub.f32 %v331, %v337
        %v345 = vsub.f32 %v333, %v342
        %v346 = vmin.f32 %v344, 0.0
        %v347 = vmin.f32 %v345, 0.0
        %v348 = vmax.f32 %v346, -100.0
        %v349 = vmax.f32 %v347, -100.0
        %v350 = vsub.f32 0.0, %v348
        %v351 = vsub.f32 0.0, %v349
        %v352 = vld [vmem:[%s226] sm:$0xff]
        %v353 = vld [vmem:[%s226 + $0x8] sm:$0xff]
        %v354 = vlaneseq
        %v355 = vand.u32 %v354, 127
        %356 = vset.pattern.permute.xlu0 0
        %357 = vperm.xlu0 %356, %v352
        %v358 = vpop.permute.xlu0 %357
        %359 = vset.pattern.permute.xlu0 0
        %360 = vperm.xlu0 %359, %v353
        %v361 = vpop.permute.xlu0 %360
        %vm362 = vcmp.eq.s32.totalorder %v355, %v358
        %vm363 = vcmp.eq.s32.totalorder %v355, %v361
        %v364 = vsel %vm362, 1, 0
        %v365 = vsel %vm363, 1, 0
        %v366 = vcvt.s32.f32 %v364
        %v367 = vcvt.s32.f32 %v365
        %v368 = vadd.f32 %v366, 0.0
        %v369 = vadd.f32 %v367, 0.0
        %370 = vset.pattern.permute.xlu0 1
        %371 = vperm.xlu0 %370, %v352
        %v372 = vpop.permute.xlu0 %371
        %373 = vset.pattern.permute.xlu0 1
        %374 = vperm.xlu0 %373, %v353
        %v375 = vpop.permute.xlu0 %374
        %vm376 = vcmp.eq.s32.totalorder %v355, %v372
        %vm377 = vcmp.eq.s32.totalorder %v355, %v375
        %v378 = vsel %vm376, 1, 0
        %v379 = vsel %vm377, 1, 0
        %v380 = vcvt.s32.f32 %v378
        %v381 = vcvt.s32.f32 %v379
        %v382 = vadd.f32 %v368, %v380
        %v383 = vadd.f32 %v369, %v381
        %s384 = smul.u32 %s17, 16
        %v385 = vlaneseq
        %v386 = vshrl.u32 %v385, 7
        %v387 = vadd.s32 %v386, 8
        %v388 = vstv %s384
        %v389 = vadd.s32 %v388, %v386
        %v390 = vadd.s32 %v388, %v387
        %vm391 = vcmp.lt.s32.totalorder %v389, 50
        %vm392 = vcmp.lt.s32.totalorder %v390, 50
        %v393 = vmul.f32 %v382, %v350
        %v394 = vmul.f32 %v383, %v351
        %v395 = vsel %vm391, %v393, 0.0
        %v396 = vsel %vm392, %v394, 0.0
        %v397 = vadd.f32 %v395, %v396
        %v398 = vrot.slane %v397, 4
        %v399 = vadd.f32 %v397, %v398
        %v400 = vrot.slane %v399, 2
        %v401 = vadd.f32 %v399, %v400
        %v402 = vrot.slane %v401, 1
        %v403 = vadd.f32 %v401, %v402
        %404 = vst [vmem:[%s203] sm:$0x1] %v403
        %s405 = sand.u32 %s98, 1
        %s406 = scalar_lea.sflag [#allocation3], %s405
        %s407 = sand.u32 %s98, 1
        %s408 = scalar_lea.vmem [#allocation2], %s407
        // Predicated region
        $region33: #{tpu_custom_call.1} parent=31 // pred_check
          %p409 = pneg %p108
        $region34: #{tpu_custom_call.1} parent=31 // pred_check_branch
          %411 = sbr.rel (%p409) target = $region36
        $region35: #{tpu_custom_call.1} parent=31 // pred_region
          %s413 = ssub.s32 16, 16
          %414 = vsyncadd %s406, %s413
          %s415 = smul.addr %s17, 16
          %s416 = scalar_lea.hbm %s3, %s415
          %s418 = sshll.u32 %s408, 4
          %s419 = int_to_ptr.vmem [resolvable:$true] %s418
          %421 = dma.vmem_to_hbm [thread:$0]  %s419, 16, %s416, %s406
        $region36: #{tpu_custom_call.1} parent=31 // pred_fallthru
          _
      $region32: #{tpu_custom_call.1} parent=5 // pred_fallthru
        _
      %p422 = scmp.le.s32.totalorder 2, %s12
      // Predicated region
      $region37: #{tpu_custom_call.1} parent=5 // pred_check
        %p423 = pneg %p422
      $region38: #{tpu_custom_call.1} parent=5 // pred_check_branch
        %425 = sbr.rel (%p423) target = $region40
      $region39: #{tpu_custom_call.1} parent=5 // pred_region
        %s426 = ssub.s32 %s12, 2
        // Predicated region
        $region41: #{tpu_custom_call.1} parent=39 // pred_check
          %p427 = pneg %p114
        $region42: #{tpu_custom_call.1} parent=39 // pred_check_branch
          %429 = sbr.rel (%p427) target = $region44
        $region43: #{tpu_custom_call.1} parent=39 // pred_region
          %s430 = sand.u32 %s99, 1
          %s431 = scalar_lea.sflag [#allocation3], %s430
          %s432 = sand.u32 %s99, 1
          %s433 = scalar_lea.vmem [#allocation2], %s432
          %434 = dma.done %s431, 16
        $region44: #{tpu_custom_call.1} parent=39 // pred_fallthru
          _
      $region40: #{tpu_custom_call.1} parent=5 // pred_fallthru
        _
    $region6: #{tpu_custom_call.1} parent=1 // loop_footer
      %s16 = sadd.s32 1, %s12
    $region7: #{tpu_custom_call.1} parent=1 // loop_footer_branch
      %11 = sbr.rel target = $region3
    $region8: #{tpu_custom_call.1} parent=1 // loop_exit
      _
    %435 = vsyncpa [#allocation3], 1
    %s436 = scalar_lea.sflag [#allocation3], 1
    %437 = vsyncpa %s436, 1

</llo_original>
